<compile_context>
chip_gen: v7x
topology: tpu7x:2x2x1
jax: 0.10.0
libtpu: 0.0.40
codegen_flags: <defaults>
</compile_context>

<pallas_src>
import jax
import jax.numpy as jnp
from jax.experimental import pallas as pl
from jax.experimental.pallas import tpu as pltpu


def _transition_up_kernel(x_ref, w_ref, b_ref, out_ref):
    """One batch element of ConvTranspose2d(k=3, s=2, p=0), packed-plane output.

    out_ref[0, hp, wp, p*Cout + co] = conv_out[2*hp + rp, 2*wp + cp, co]
    with parity plane p = 2*rp + cp. The extra row (odd-row planes) / extra
    col (odd-col planes) hold bias-only junk and are cropped by the wrapper.

    conv_out[2*ih + kh, 2*iw + kw, :] += x[ih, iw, :] @ W[:, :, kh, kw]
    With kh = 2*sh + rp, kw = 2*sw + cp this is, per shift group g = 2*sh + sw,
    one shifted add of one lane-slice of a single fused matmul.
    """
    _, H, W, Cin = x_ref.shape
    GC = b_ref.shape[-1]                       # packed lane width = 4 * Cout

    xf = x_ref[0].reshape(H * W, Cin)
    # single fused MXU call: (H*W, Cin) @ (Cin, 4*GC) -> all 9 taps at once
    taps = jnp.dot(xf, w_ref[...], preferred_element_type=jnp.float32)
    taps = taps.reshape(H, W, 4 * GC)

    # register accumulation of the packed output; bias applied exactly once
    acc = jnp.broadcast_to(b_ref[...].reshape(1, 1, GC), (H + 1, W + 1, GC))
    zcol = jnp.zeros((H, 1, GC), jnp.float32)
    zrow = jnp.zeros((1, W + 1, GC), jnp.float32)

    # shift groups g = 2*sh + sw: shift rows by sh, cols by sw (zero fill)
    for g, (sh, sw) in enumerate(((0, 0), (0, 1), (1, 0), (1, 1))):
        t = taps[:, :, g * GC:(g + 1) * GC]                         # (H, W, GC)
        t = jnp.concatenate([zcol, t] if sw else [t, zcol], axis=1)  # (H, W+1, GC)
        t = jnp.concatenate([zrow, t] if sh else [t, zrow], axis=0)  # (H+1, W+1, GC)
        acc = acc + t

    out_ref[0] = acc                           # single lane-dense store


def _pack_params(weight_pt, bias):
    """Pack torch ConvTranspose2d params for the fused kernel.

    weight_pt: (Cin, Cout, 3, 3) -> (Cin, 16*Cout) ordered (shift group, plane, Cout)
    bias:      (Cout,)           -> (1, 4*Cout)   tiled once per parity plane
    Unused (group, plane) slots stay zero.
    """
    Cin, Cout = weight_pt.shape[0], weight_pt.shape[1]
    wf = jnp.zeros((Cin, 4, 4, Cout), weight_pt.dtype)
    for kh in range(3):
        for kw in range(3):
            g = (kh // 2) * 2 + (kw // 2)      # shift group
            p = (kh % 2) * 2 + (kw % 2)        # parity plane
            wf = wf.at[:, g, p, :].set(weight_pt[:, :, kh, kw])
    w_fused = wf.reshape(Cin, 16 * Cout)
    b_packed = jnp.tile(bias, 4).reshape(1, 4 * Cout)
    return w_fused, b_packed


def conv_transpose_2x_packed(x_nhwc, w_fused, b_packed):
    """Returns the packed parity-plane output (N, H+1, W+1, 4*Cout), f32."""
    N, H, W, Cin = x_nhwc.shape
    GC = b_packed.shape[-1]

    # VMEM sizing: raise the scoped limit only when whole-image blocks outgrow
    # the 32 MiB default (double-buffered in/out + fused-tap temporaries).
    itemsize = 4
    est = (2 * (H * W * Cin + Cin * 4 * GC + (H + 1) * (W + 1) * GC)
           + H * W * 4 * GC + (H + 1) * (W + 1) * GC) * itemsize
    vmem_limit = None
    if est > 32 * 1024 * 1024:
        # TODO(synk): for v7x (64 MiB VMEM, 2 TCs) add an H-tiled grid axis with a
        # 1-row output halo instead of only raising the scoped VMEM limit.
        vmem_limit = min(int(est * 5 // 4), 120 * 1024 * 1024)

    return pl.pallas_call(
        _transition_up_kernel,
        out_shape=jax.ShapeDtypeStruct((N, H + 1, W + 1, GC), jnp.float32),
        grid_spec=pltpu.PrefetchScalarGridSpec(
            num_scalar_prefetch=0,
            grid=(N,),
            in_specs=[
                pl.BlockSpec((1, H, W, Cin), lambda n: (n, 0, 0, 0)),
                pl.BlockSpec((Cin, 4 * GC), lambda n: (0, 0)),
                pl.BlockSpec((1, GC), lambda n: (0, 0)),
            ],
            out_specs=pl.BlockSpec((1, H + 1, W + 1, GC),
                                   lambda n: (n, 0, 0, 0)),
        ),
        compiler_params=pltpu.CompilerParams(
            dimension_semantics=("parallel",),
            vmem_limit_bytes=vmem_limit),
    )(x_nhwc, w_fused, b_packed)


def _conv_transpose_crop_nhwc(x_nhwc, weight_pt, bias, Hs, Ws):
    """ConvTranspose2d(k=3, s=2, p=0) followed by center_crop to (Hs, Ws), NHWC."""
    N, H, W, _ = x_nhwc.shape
    Cout = weight_pt.shape[1]
    w_fused, b_packed = _pack_params(weight_pt, bias)
    packed = conv_transpose_2x_packed(x_nhwc, w_fused, b_packed)

    # depth-to-space interleave of the parity planes (no scatters), then crop.
    planes = packed.reshape(N, H + 1, W + 1, 2, 2, Cout)          # (.., rp, cp, C)
    full = planes.transpose(0, 1, 3, 2, 4, 5).reshape(
        N, 2 * H + 2, 2 * W + 2, Cout)
    Hf, Wf = 2 * H + 1, 2 * W + 1             # valid transposed-conv extent
    xy1 = (Wf - Ws) // 2
    xy2 = (Hf - Hs) // 2
    return full[:, xy2:xy2 + Hs, xy1:xy1 + Ws, :]


def transition_up_forward_nhwc(x_nhwc, skip_nhwc, weight_pt, bias):
    """NHWC TransitionUp: conv-transpose, center-crop to skip, concat channels."""
    Hs, Ws = skip_nhwc.shape[1], skip_nhwc.shape[2]
    out = _conv_transpose_crop_nhwc(x_nhwc, weight_pt, bias, Hs, Ws)
    return jnp.concatenate([out, skip_nhwc], axis=-1)


def transition_up_forward(x_nchw, skip_nchw, weight_pt, bias):
    """Matches TransitionUp.forward(x, skip) with PyTorch NCHW tensors.

    x_nchw:    (N, Cin, H, W)
    skip:      (N, Cskip, Hs, Ws)
    weight_pt: (Cin, Cout, 3, 3)   torch ConvTranspose2d weight layout
    bias:      (Cout,)
    returns    (N, Cout + Cskip, Hs, Ws)
    Only x and the already-cropped conv output are relaid out; skip and the
    concat stay in NCHW (use transition_up_forward_nhwc for NHWC models).
    """
    Hs, Ws = skip_nchw.shape[2], skip_nchw.shape[3]
    x_nhwc = jnp.transpose(x_nchw, (0, 2, 3, 1))
    out_nhwc = _conv_transpose_crop_nhwc(x_nhwc, weight_pt, bias, Hs, Ws)
    out_nchw = jnp.transpose(out_nhwc, (0, 3, 1, 2))
    return jnp.concatenate([out_nchw, skip_nchw], axis=1)


def _ref_forward(x, skip, weight, bias):
    """Pure-JAX reference for the whole TransitionUp forward (NCHW)."""
    N, Cin, H, W = x.shape
    Cout = weight.shape[1]
    out = jnp.zeros((N, Cout, 2 * H + 1, 2 * W + 1), jnp.float32)
    out = out + bias[None, :, None, None]
    for kh in range(3):
        for kw in range(3):
            t = jnp.einsum('nchw,cd->ndhw', x, weight[:, :, kh, kw],
                           precision=jax.lax.Precision.HIGHEST)
            out = out.at[:, :, kh:kh + 2 * H:2, kw:kw + 2 * W:2].add(t)
    Hs, Ws = skip.shape[2], skip.shape[3]
    xy1 = (out.shape[3] - Ws) // 2
    xy2 = (out.shape[2] - Hs) // 2
    out = out[:, :, xy2:xy2 + Hs, xy1:xy1 + Ws]
    return jnp.concatenate([out, skip], axis=1)


if __name__ == "__main__":
    key = jax.random.PRNGKey(0)
    k1, k2, k3, k4 = jax.random.split(key, 4)

    # small shapes consistent with the module
    N, Cin, H, W = 2, 4, 8, 8          # x: input to ConvTranspose2d
    Cout = 5                           # ConvTranspose2d out_channels
    Cskip, Hs, Ws = 6, 16, 16          # skip connection (<= 2H+1, 2W+1)

    x = jax.random.normal(k1, (N, Cin, H, W), dtype=jnp.float32)
    skip = jax.random.normal(k2, (N, Cskip, Hs, Ws), dtype=jnp.float32)
    # deterministic parameter init (same shapes as nn.ConvTranspose2d(Cin, Cout, 3))
    weight = jax.random.normal(k3, (Cin, Cout, 3, 3), dtype=jnp.float32) * 0.1
    bias = jax.random.normal(k4, (Cout,), dtype=jnp.float32) * 0.1

    out = jax.jit(transition_up_forward)(x, skip, weight, bias)
    out = jax.block_until_ready(out)

    assert out.shape == (N, Cout + Cskip, Hs, Ws), out.shape

    # reference uses HIGHEST precision; kernel uses DEFAULT -> loosened tolerance
    ref = _ref_forward(x, skip, weight, bias)
    max_err = float(jnp.max(jnp.abs(out - ref)))
    assert jnp.allclose(out, ref, atol=1e-2, rtol=1e-2), max_err

    print("KERNEL_OK")
</pallas_src>

<mosaic_0001>
module attributes {stable_mosaic.version = 11 : i64} {
  func.func @_transition_up_kernel(%arg0: i32, %arg1: memref<1x8x8x4xf32, #tpu.memory_space<vmem>>, %arg2: memref<4x80xf32, #tpu.memory_space<vmem>>, %arg3: memref<1x20xf32, #tpu.memory_space<vmem>>, %arg4: memref<1x9x9x20xf32, #tpu.memory_space<vmem>>) attributes {dimension_semantics = [#tpu.dimension_semantics<parallel>], iteration_bounds = array<i64: 2>, scalar_prefetch = 0 : i64, scratch_operands = 0 : i64, tpu.core_type = #tpu.core_type<tc>, window_params = [{transform_indices = @transform_0, window_bounds = array<i64: 1, 8, 8, 4>}, {pipeline_mode = #tpu.pipeline_mode<synchronous>, transform_indices = @transform_1, window_bounds = array<i64: 4, 80>}, {pipeline_mode = #tpu.pipeline_mode<synchronous>, transform_indices = @transform_2, window_bounds = array<i64: 1, 20>}, {transform_indices = @transform_3, window_bounds = array<i64: 1, 9, 9, 20>}]} {
    %c0 = arith.constant 0 : index
    %c0_0 = arith.constant 0 : index
    %c0_1 = arith.constant 0 : index
    %c0_2 = arith.constant 0 : index
    %0 = vector.load %arg1[%c0, %c0_0, %c0_1, %c0_2] : memref<1x8x8x4xf32, #tpu.memory_space<vmem>>, vector<1x8x8x4xf32>
    %1 = vector.shape_cast %0 : vector<1x8x8x4xf32> to vector<8x8x4xf32>
    %2 = vector.shape_cast %1 : vector<8x8x4xf32> to vector<64x4xf32>
    %c0_3 = arith.constant 0 : index
    %c0_4 = arith.constant 0 : index
    %3 = vector.load %arg2[%c0_3, %c0_4] : memref<4x80xf32, #tpu.memory_space<vmem>>, vector<4x80xf32>
    %cst = arith.constant dense<0.000000e+00> : vector<64x80xf32>
    %4 = tpu.matmul %2, %3, %cst {dimension_numbers = #tpu.dot_dimension_numbers<[1], [0], [0], [1], [0, 0, 1, 1], [], []>} : vector<64x4xf32>, vector<4x80xf32>, vector<64x80xf32> -> vector<64x80xf32>
    %5 = vector.shape_cast %4 : vector<64x80xf32> to vector<8x8x80xf32>
    %c0_5 = arith.constant 0 : index
    %c0_6 = arith.constant 0 : index
    %6 = vector.load %arg3[%c0_5, %c0_6] : memref<1x20xf32, #tpu.memory_space<vmem>>, vector<1x20xf32>
    %7 = vector.shape_cast %6 : vector<1x20xf32> to vector<1x1x20xf32>
    %8 = vector.shape_cast %7 : vector<1x1x20xf32> to vector<1x1x20xf32>
    %9 = vector.broadcast %8 : vector<1x1x20xf32> to vector<9x9x20xf32>
    %cst_7 = arith.constant 0.000000e+00 : f32
    %10 = vector.broadcast %cst_7 : f32 to vector<8x1x20xf32>
    %cst_8 = arith.constant 0.000000e+00 : f32
    %11 = vector.broadcast %cst_8 : f32 to vector<1x9x20xf32>
    %12 = vector.extract_strided_slice %5 {offsets = [0, 0, 0], sizes = [8, 8, 20], strides = [1, 1, 1]} : vector<8x8x80xf32> to vector<8x8x20xf32>
    %13 = tpu.concatenate %12, %10 in 1 : vector<8x8x20xf32>, vector<8x1x20xf32> -> vector<8x9x20xf32>
    %14 = tpu.concatenate %13, %11 in 0 : vector<8x9x20xf32>, vector<1x9x20xf32> -> vector<9x9x20xf32>
    %15 = arith.addf %9, %14 : vector<9x9x20xf32>
    %16 = vector.extract_strided_slice %5 {offsets = [0, 0, 20], sizes = [8, 8, 20], strides = [1, 1, 1]} : vector<8x8x80xf32> to vector<8x8x20xf32>
    %17 = tpu.concatenate %10, %16 in 1 : vector<8x1x20xf32>, vector<8x8x20xf32> -> vector<8x9x20xf32>
    %18 = tpu.concatenate %17, %11 in 0 : vector<8x9x20xf32>, vector<1x9x20xf32> -> vector<9x9x20xf32>
    %19 = arith.addf %15, %18 : vector<9x9x20xf32>
    %20 = vector.extract_strided_slice %5 {offsets = [0, 0, 40], sizes = [8, 8, 20], strides = [1, 1, 1]} : vector<8x8x80xf32> to vector<8x8x20xf32>
    %21 = tpu.concatenate %20, %10 in 1 : vector<8x8x20xf32>, vector<8x1x20xf32> -> vector<8x9x20xf32>
    %22 = tpu.concatenate %11, %21 in 0 : vector<1x9x20xf32>, vector<8x9x20xf32> -> vector<9x9x20xf32>
    %23 = arith.addf %19, %22 : vector<9x9x20xf32>
    %24 = vector.extract_strided_slice %5 {offsets = [0, 0, 60], sizes = [8, 8, 20], strides = [1, 1, 1]} : vector<8x8x80xf32> to vector<8x8x20xf32>
    %25 = tpu.concatenate %10, %24 in 1 : vector<8x1x20xf32>, vector<8x8x20xf32> -> vector<8x9x20xf32>
    %26 = tpu.concatenate %11, %25 in 0 : vector<1x9x20xf32>, vector<8x9x20xf32> -> vector<9x9x20xf32>
    %27 = arith.addf %23, %26 : vector<9x9x20xf32>
    %c0_9 = arith.constant 0 : index
    %c0_10 = arith.constant 0 : index
    %c0_11 = arith.constant 0 : index
    %c0_12 = arith.constant 0 : index
    %28 = vector.load %arg4[%c0_9, %c0_10, %c0_11, %c0_12] : memref<1x9x9x20xf32, #tpu.memory_space<vmem>>, vector<1x9x9x20xf32>
    %29 = vector.shape_cast %28 : vector<1x9x9x20xf32> to vector<9x9x20xf32>
    %30 = vector.shape_cast %27 : vector<9x9x20xf32> to vector<1x9x9x20xf32>
    tpu.vector_store %arg4[%c0_9, %c0_10, %c0_11, %c0_12], %30 {strides = array<i32>} : memref<1x9x9x20xf32, #tpu.memory_space<vmem>>, vector<1x9x9x20xf32>,
    return
  }
  func.func @transform_0(%arg0: i32) -> (i32, i32, i32, i32) {
    %c0_i32 = arith.constant 0 : i32
    %c0_i32_0 = arith.constant 0 : i32
    %c0_i32_1 = arith.constant 0 : i32
    %c0_i32_2 = arith.constant 0 : i32
    return %arg0, %c0_i32, %c0_i32_0, %c0_i32_1 : i32, i32, i32, i32
  }
  func.func @transform_1(%arg0: i32) -> (i32, i32) {
    %c0_i32 = arith.constant 0 : i32
    %c0_i32_0 = arith.constant 0 : i32
    %c0_i32_1 = arith.constant 0 : i32
    return %c0_i32, %c0_i32_0 : i32, i32
  }
  func.func @transform_2(%arg0: i32) -> (i32, i32) {
    %c0_i32 = arith.constant 0 : i32
    %c0_i32_0 = arith.constant 0 : i32
    %c0_i32_1 = arith.constant 0 : i32
    return %c0_i32, %c0_i32_0 : i32, i32
  }
  func.func @transform_3(%arg0: i32) -> (i32, i32, i32, i32) {
    %c0_i32 = arith.constant 0 : i32
    %c0_i32_0 = arith.constant 0 : i32
    %c0_i32_1 = arith.constant 0 : i32
    %c0_i32_2 = arith.constant 0 : i32
    return %arg0, %c0_i32, %c0_i32_0, %c0_i32_1 : i32, i32, i32, i32
  }
}

</mosaic_0001>

<llo_original>
// kernel: tile.8
$region0: #{tile.8}
  #allocation0 [shape = 's32[1]{0}', space=sflag, size = 0x4, scoped, tag = 'scoped memory for tile.8']
  %s0 = inlined_call_operand.vmem [shape: f32[5], index: 0, kind: input, shape index: {}]
  %s1 = inlined_call_operand.vmem [shape: f32[4,5], index: 1, kind: output, shape index: {}]
  // Predicated region
  $region2: #{tile.8} parent=0 // pred_check
    _
  $region3: #{tile.8} parent=0 // pred_check_branch
    %3 = sbr.rel (0) target = $region5
  $region4: #{tile.8} parent=0 // pred_region
    _
  $region5: #{tile.8} parent=0 // pred_fallthru
    _
  %v4 = vld [vmem:[%s0] ss:$0 sm:$0xff]
  %5 = vst [vmem:[%s1] sm:$0xf] %v4

// kernel: tile.9
$region0: #{tile.9}
  %s0 = inlined_call_operand.vmem [shape: f32[4,5], index: 0, kind: input, shape index: {}]
  %s1 = inlined_call_operand.vmem [shape: f32[1,20], index: 1, kind: output, shape index: {}]
  $region1: #{tile.9} parent=0
    #allocation0 [shape = 'u8[4096]{0}', space=vmem, size = 0x1000, scoped, tag = 'scoped mem for output reshape']
    #allocation1 [shape = 'u8[4096]{0}', space=vmem, size = 0x1000, scoped, tag = 'scoped mem for input reshape']
    %s3 = sshllo.u32 0, 4
    %v4 = vld [vmem:[%s0] sm:%s3]
    %5 = vst [vmem:[#allocation1] sm:%s3] %v4
    %v6 = vld [vmem:[#allocation1] sm:$0x1]
    %vm7 = vcmask 39936
    %8 = vst.msk [vmem:[#allocation0] sm:$0x1] %vm7, %v6
    %s9 = scalar_lea.vmem [#allocation1], 3
    %v10 = vld [vmem:[%s9] sm:$0x1]
    %11 = vrot.lane.b32.xlu0 %v10, 15
    %v12 = vpop.permute.xlu0 %11
    %vm13 = vcmask 162936
    %14 = vst.msk [vmem:[#allocation0] sm:$0x1] %vm13, %v12
    %s15 = scalar_lea.vmem [#allocation1], 2
    %v16 = vld [vmem:[%s15] sm:$0x1]
    %17 = vrot.lane.b32.xlu0 %v16, 10
    %v18 = vpop.permute.xlu0 %17
    %vm19 = vcmask 121936
    %20 = vst.msk [vmem:[#allocation0] sm:$0x1] %vm19, %v18
    %s21 = scalar_lea.vmem [#allocation1], 1
    %v22 = vld [vmem:[%s21] sm:$0x1]
    %23 = vrot.lane.b32.xlu0 %v22, 5
    %v24 = vpop.permute.xlu0 %23
    %vm25 = vcmask 80936
    %26 = vst.msk [vmem:[#allocation0] sm:$0x1] %vm25, %v24
    %s28 = sshllo.u32 0, 1
    %v30 = vld [vmem:[#allocation0] sm:%s28]
    %s31 = sshllo.u32 0, 1
    %32 = vst [vmem:[%s1] sm:%s31] %v30

// kernel: transition_up_forward.1
$region0: #{transition_up_forward.1}
  #allocation0 [shape = 'u32[]', space=smem, size = 0x4, offset = 0x4, fixed_abs, tag = 'smem constant byte address 0x4 - core index']
  #allocation1 [shape = 'u32[144,128]{1,0:T(1,128)}', space=vmem, size = 0x12000, scoped, tag = 'internal scratch']
  %s0 = inlined_call_operand.vmem [shape: f32[2,8,8,4], index: 0, kind: input, shape index: {}]
  %s1 = inlined_call_operand.vmem [shape: f32[4,80], index: 1, kind: input, shape index: {}]
  %s2 = inlined_call_operand.vmem [shape: f32[1,20], index: 2, kind: input, shape index: {}]
  %s3 = inlined_call_operand.vmem [shape: f32[2,9,9,20], index: 3, kind: output, shape index: {}]
  %s4 = sld [smem:[#allocation0]]
  $region45: #{transition_up_forward.1} parent=0
    _
  %s6 = ssub.s32 1, %s4
  %s7 = scalar_select 0, %s6, %s4
  loop: start=0, step=1, limit=4
  $region2: #{transition_up_forward.1} parent=0 // loop_pre_header
    _
  $region3: #{transition_up_forward.1} parent=0 // loop_header
    %s9 = sphi 0, %s13
    %p10 = scmp.ge.s32.totalorder %s9, 4
    %s19 = sphi 0, %s21
    %s22 = sphi 0, %s19
    %s23 = sphi 0, %s22
    %s39 = sphi 0, %s23
    %s43 = sphi 0, %s43
    %s45 = sphi 0, %s43
    %s46 = sphi 0, %s45
    %s60 = sphi 0, %s46
    %s64 = sphi 0, %s64
    %s66 = sphi 0, %s64
    %s67 = sphi 0, %s66
    %s81 = sphi 0, %s67
    %s87 = sphi 0, %s89
    %s90 = sphi 0, %s87
    %s91 = sphi 0, %s90
    %s107 = sphi 0, %s91
  $region4: #{transition_up_forward.1} parent=0 // loop_header_branch
    %12 = sbr.rel (%p10) target = $region8
  $region5: #{transition_up_forward.1} parent=0 // loop_body
    %s14 = ssub.s32 %s9, 1
    %s15 = ssub.s32 %s9, 2
    %s16 = sadd.s32 %s9, 1
    %s17 = ssub.s32 %s9, %s16
    %p18 = scmp.eq.s32.totalorder %s17, 0
    %s20 = sadd.s32 %s19, 1
    %s21 = scalar_select %p18, %s19, %s20
    %p24 = pneg %p18
    %p25 = scmp.eq.s32.totalorder %s9, 1
    %p26 = por %p24, %p25
    %p27 = scmp.ne.s32.totalorder %s19, %s22
    %p28 = scmp.eq.s32.totalorder %s9, 0
    %p29 = por %p27, %p28
    %p30 = scmp.ne.s32.totalorder %s19, %s22
    %p31 = scmp.eq.s32.totalorder %s14, 1
    %p32 = por %p30, %p31
    %p33 = scmp.ne.s32.totalorder %s22, %s23
    %p34 = scmp.eq.s32.totalorder %s14, 0
    %p35 = por %p33, %p34
    %p36 = scmp.ne.s32.totalorder %s22, %s23
    %p37 = scmp.eq.s32.totalorder %s15, 1
    %p38 = por %p36, %p37
    %p40 = scmp.ne.s32.totalorder %s23, %s39
    %p41 = scmp.eq.s32.totalorder %s15, 0
    %p42 = por %p40, %p41
    %s44 = sadd.s32 %s43, 1
    %p47 = scmp.eq.s32.totalorder %s9, 1
    %p48 = scmp.ne.s32.totalorder %s43, %s45
    %p49 = scmp.eq.s32.totalorder %s9, 0
    %p50 = por %p48, %p49
    %p51 = scmp.ne.s32.totalorder %s43, %s45
    %p52 = scmp.eq.s32.totalorder %s14, 1
    %p53 = por %p51, %p52
    %p54 = scmp.ne.s32.totalorder %s45, %s46
    %p55 = scmp.eq.s32.totalorder %s14, 0
    %p56 = por %p54, %p55
    %p57 = scmp.ne.s32.totalorder %s45, %s46
    %p58 = scmp.eq.s32.totalorder %s15, 1
    %p59 = por %p57, %p58
    %p61 = scmp.ne.s32.totalorder %s46, %s60
    %p62 = scmp.eq.s32.totalorder %s15, 0
    %p63 = por %p61, %p62
    %s65 = sadd.s32 %s64, 1
    %p68 = scmp.eq.s32.totalorder %s9, 1
    %p69 = scmp.ne.s32.totalorder %s64, %s66
    %p70 = scmp.eq.s32.totalorder %s9, 0
    %p71 = por %p69, %p70
    %p72 = scmp.ne.s32.totalorder %s64, %s66
    %p73 = scmp.eq.s32.totalorder %s14, 1
    %p74 = por %p72, %p73
    %p75 = scmp.ne.s32.totalorder %s66, %s67
    %p76 = scmp.eq.s32.totalorder %s14, 0
    %p77 = por %p75, %p76
    %p78 = scmp.ne.s32.totalorder %s66, %s67
    %p79 = scmp.eq.s32.totalorder %s15, 1
    %p80 = por %p78, %p79
    %p82 = scmp.ne.s32.totalorder %s67, %s81
    %p83 = scmp.eq.s32.totalorder %s15, 0
    %p84 = por %p82, %p83
    %s85 = ssub.s32 %s9, %s16
    %p86 = scmp.eq.s32.totalorder %s85, 0
    %s88 = sadd.s32 %s87, 1
    %s89 = scalar_select %p86, %s87, %s88
    %p92 = pneg %p86
    %p93 = scmp.eq.s32.totalorder %s9, 1
    %p94 = por %p92, %p93
    %p95 = scmp.ne.s32.totalorder %s87, %s90
    %p96 = scmp.eq.s32.totalorder %s9, 0
    %p97 = por %p95, %p96
    %p98 = scmp.ne.s32.totalorder %s87, %s90
    %p99 = scmp.eq.s32.totalorder %s14, 1
    %p100 = por %p98, %p99
    %p101 = scmp.ne.s32.totalorder %s90, %s91
    %p102 = scmp.eq.s32.totalorder %s14, 0
    %p103 = por %p101, %p102
    %p104 = scmp.ne.s32.totalorder %s90, %s91
    %p105 = scmp.eq.s32.totalorder %s15, 1
    %p106 = por %p104, %p105
    %p108 = scmp.ne.s32.totalorder %s91, %s107
    %p109 = scmp.eq.s32.totalorder %s15, 0
    %p110 = por %p108, %p109
    %p111 = scmp.le.s32.totalorder 1, %s9
    %p112 = scmp.lt.s32.totalorder %s9, 3
    %p113 = pnand %p111, %p112
    %p114 = pneg %p113
    // Predicated region
    $region9: #{transition_up_forward.1} parent=5 // pred_check
      _
    $region10: #{transition_up_forward.1} parent=5 // pred_check_branch
      %116 = sbr.rel (%p113) target = $region12
    $region11: #{transition_up_forward.1} parent=5 // pred_region
      %s117 = ssub.s32 %s9, 1
      // Predicated region
      $region13: #{transition_up_forward.1} parent=11 // pred_check
        %p118 = pneg %p56
      $region14: #{transition_up_forward.1} parent=11 // pred_check_branch
        %120 = sbr.rel (%p118) target = $region16
      $region15: #{transition_up_forward.1} parent=11 // pred_region
        _
      $region16: #{transition_up_forward.1} parent=11 // pred_fallthru
        _
      // Predicated region
      $region17: #{transition_up_forward.1} parent=11 // pred_check
        %p121 = pneg %p77
      $region18: #{transition_up_forward.1} parent=11 // pred_check_branch
        %123 = sbr.rel (%p121) target = $region20
      $region19: #{transition_up_forward.1} parent=11 // pred_region
        _
      $region20: #{transition_up_forward.1} parent=11 // pred_fallthru
        _
    $region12: #{transition_up_forward.1} parent=5 // pred_fallthru
      _
    %p124 = scmp.lt.s32.totalorder %s9, 2
    // Predicated region
    $region21: #{transition_up_forward.1} parent=5 // pred_check
      %p125 = pneg %p124
    $region22: #{transition_up_forward.1} parent=5 // pred_check_branch
      %127 = sbr.rel (%p125) target = $region24
    $region23: #{transition_up_forward.1} parent=5 // pred_region
      // Predicated region
      $region25: #{transition_up_forward.1} parent=23 // pred_check
        %p128 = pneg %p29
      $region26: #{transition_up_forward.1} parent=23 // pred_check_branch
        %130 = sbr.rel (%p128) target = $region28
      $region27: #{transition_up_forward.1} parent=23 // pred_region
        %p131 = scmp.lt.s32.totalorder %s9, 1
        %s132 = scalar_select %p131, %s9, 1
        %s133 = smul.addr %s132, 8
        %s134 = smul.addr %s133, 8
        %s135 = scalar_lea.vmem %s0, %s134
      $region28: #{transition_up_forward.1} parent=23 // pred_fallthru
        _
    $region24: #{transition_up_forward.1} parent=5 // pred_fallthru
      _
    %p136 = scmp.le.s32.totalorder 1, %s9
    %p137 = scmp.lt.s32.totalorder %s9, 3
    %p138 = pnand %p136, %p137
    %p139 = pneg %p138
    // Predicated region
    $region29: #{transition_up_forward.1} parent=5 // pred_check
      _
    $region30: #{transition_up_forward.1} parent=5 // pred_check_branch
      %141 = sbr.rel (%p138) target = $region32
    $region31: #{transition_up_forward.1} parent=5 // pred_region
      %s142 = ssub.s32 %s9, 1
      %p143 = scmp.lt.s32.totalorder %s14, 1
      %s144 = scalar_select %p143, %s14, 1
      %s145 = smul.addr %s144, 8
      %s146 = smul.addr %s145, 8
      %s147 = scalar_lea.vmem %s0, %s146
      %p148 = pneg %p35
      %p149 = pneg %p32
      %p150 = pneg %p56
      %p151 = pneg %p53
      %p152 = pneg %p77
      %p153 = pneg %p74
      %p154 = pneg %p103
      %p155 = pneg %p100
      %p156 = scmp.lt.s32.totalorder %s14, 1
      %s157 = scalar_select %p156, %s14, 1
      %s158 = smul.addr %s157, 18
      %s159 = smul.addr %s158, 8
      %s160 = scalar_lea.vmem %s3, %s159
      %p161 = scmp.lt.s32.totalorder %s14, 1
      %s162 = scalar_select %p161, %s14, 1
      %s163 = smul.addr %s162, 8
      %s164 = smul.addr %s163, 8
      %s165 = scalar_lea.vmem %s0, %s164
      %p166 = scmp.lt.s32.totalorder %s14, 1
      %s167 = scalar_select %p166, %s14, 1
      %s168 = smul.addr %s167, 18
      %s169 = smul.addr %s168, 8
      %s170 = scalar_lea.vmem %s3, %s169
      %v171 = vld [vmem:[%s165] sm:$0xff]
      %v172 = vld [vmem:[%s165 + $0x8] sm:$0xff]
      %v173 = vld [vmem:[%s165 + $0x10] sm:$0xff]
      %v174 = vld [vmem:[%s165 + $0x18] sm:$0xff]
      %v175 = vld [vmem:[%s165 + $0x20] sm:$0xff]
      %v176 = vld [vmem:[%s165 + $0x28] sm:$0xff]
      %v177 = vld [vmem:[%s165 + $0x30] sm:$0xff]
      %v178 = vld [vmem:[%s165 + $0x38] sm:$0xff]
      %v179 = vld [vmem:[%s1] sm:$0xf]
      %vm180 = vcmask 31744
      %v182 = vsel %vm180, %v171, 0
      %v185 = vsel %vm180, %v172, 0
      %v188 = vsel %vm180, %v173, 0
      %v191 = vsel %vm180, %v174, 0
      %v194 = vsel %vm180, %v175, 0
      %v197 = vsel %vm180, %v176, 0
      %v200 = vsel %vm180, %v177, 0
      %v203 = vsel %vm180, %v178, 0
      %vm205 = vcmask 1043456
      %v207 = vsel %vm205, %v179, 0
      %209 = vmatprep.subr.mxu0 0.0
      %210 = vmatpush1.msra.mxu0 %v207
      %211 = vmatprep.subr.mxu0 0.0
      %212 = vmatpush1.msra.mxu0 0.0
      %213 = vmatprep.subr.mxu0 0.0
      %214 = vmatpush1.msra.mxu0 0.0
      %215 = vmatprep.subr.mxu0 0.0
      %216 = vmatpush1.msra.mxu0 0.0
      %217 = vmatprep.subr.mxu0 0.0
      %218 = vmatpush1.msra.mxu0 0.0
      %219 = vmatprep.subr.mxu0 0.0
      %220 = vmatpush1.msra.mxu0 0.0
      %221 = vmatprep.subr.mxu0 0.0
      %222 = vmatpush1.msra.mxu0 0.0
      %223 = vmatprep.subr.mxu0 0.0
      %224 = vmatpush1.msra.mxu0 0.0
      %225 = vmatprep.subr.mxu0 0.0
      %226 = vmatpush1.msra.mxu0 0.0
      %227 = vmatprep.subr.mxu0 0.0
      %228 = vmatpush1.msra.mxu0 0.0
      %229 = vmatprep.subr.mxu0 0.0
      %230 = vmatpush1.msra.mxu0 0.0
      %231 = vmatprep.subr.mxu0 0.0
      %232 = vmatpush1.msra.mxu0 0.0
      %233 = vmatprep.subr.mxu0 0.0
      %234 = vmatpush1.msra.mxu0 0.0
      %235 = vmatprep.subr.mxu0 0.0
      %236 = vmatpush1.msra.mxu0 0.0
      %237 = vmatprep.subr.mxu0 0.0
      %238 = vmatpush1.msra.mxu0 0.0
      %239 = vmatprep.subr.mxu0 0.0
      %240 = vmatpush1.msra.mxu0 0.0
      %241 = vmatprep.subr.mxu0 0.0
      %242 = vmatpush1.msra.mxu0 0.0
      %243 = vmatprep.subr.mxu0 0.0
      %244 = vmatpush1.msra.mxu0 0.0
      %245 = vmatprep.subr.mxu0 0.0
      %246 = vmatpush1.msra.mxu0 0.0
      %247 = vmatprep.subr.mxu0 0.0
      %248 = vmatpush1.msra.mxu0 0.0
      %249 = vmatprep.subr.mxu0 0.0
      %250 = vmatpush1.msra.mxu0 0.0
      %251 = vmatprep.subr.mxu0 0.0
      %252 = vmatpush1.msra.mxu0 0.0
      %253 = vmatprep.subr.mxu0 0.0
      %254 = vmatpush1.msra.mxu0 0.0
      %255 = vmatprep.subr.mxu0 0.0
      %256 = vmatpush1.msra.mxu0 0.0
      %257 = vmatprep.subr.mxu0 0.0
      %258 = vmatpush1.msra.mxu0 0.0
      %259 = vmatprep.subr.mxu0 0.0
      %260 = vmatpush1.msra.mxu0 0.0
      %261 = vmatprep.subr.mxu0 0.0
      %262 = vmatpush1.msra.mxu0 0.0
      %263 = vmatprep.subr.mxu0 0.0
      %264 = vmatpush1.msra.mxu0 0.0
      %265 = vmatprep.subr.mxu0 0.0
      %266 = vmatpush1.msra.mxu0 0.0
      %267 = vmatprep.subr.mxu0 0.0
      %268 = vmatpush1.msra.mxu0 0.0
      %269 = vmatprep.subr.mxu0 0.0
      %270 = vmatpush1.msra.mxu0 0.0
      %271 = vmatprep.subr.mxu0 0.0
      %272 = vmatpush1.msra.mxu0 0.0
      %273 = vmatprep.mubr.f32.mxu0 0.0
      %274 = vmatmul.mubr.f32.gmra.mrb[0].mxu0 %v182
      %v275 = vpop.f32.mrb[0].mxu0
      %v276 = vadd.f32 0.0, %v275
      %v277 = vpop.f32.mrb[0].mxu0
      %278 = vmatprep.mubr.f32.mxu0 0.0
      %279 = vmatmul.mubr.f32.gmra.mrb[0].mxu0 %v185
      %v280 = vpop.f32.mrb[0].mxu0
      %v281 = vadd.f32 0.0, %v280
      %v282 = vpop.f32.mrb[0].mxu0
      %283 = vmatprep.mubr.f32.mxu0 0.0
      %284 = vmatmul.mubr.f32.gmra.mrb[0].mxu0 %v188
      %v285 = vpop.f32.mrb[0].mxu0
      %v286 = vadd.f32 0.0, %v285
      %v287 = vpop.f32.mrb[0].mxu0
      %288 = vmatprep.mubr.f32.mxu0 0.0
      %289 = vmatmul.mubr.f32.gmra.mrb[0].mxu0 %v191
      %v290 = vpop.f32.mrb[0].mxu0
      %v291 = vadd.f32 0.0, %v290
      %v292 = vpop.f32.mrb[0].mxu0
      %293 = vmatprep.mubr.f32.mxu0 0.0
      %294 = vmatmul.mubr.f32.gmra.mrb[0].mxu0 %v194
      %v295 = vpop.f32.mrb[0].mxu0
      %v296 = vadd.f32 0.0, %v295
      %v297 = vpop.f32.mrb[0].mxu0
      %298 = vmatprep.mubr.f32.mxu0 0.0
      %299 = vmatmul.mubr.f32.gmra.mrb[0].mxu0 %v197
      %v300 = vpop.f32.mrb[0].mxu0
      %v301 = vadd.f32 0.0, %v300
      %v302 = vpop.f32.mrb[0].mxu0
      %303 = vmatprep.mubr.f32.mxu0 0.0
      %304 = vmatmul.mubr.f32.gmra.mrb[0].mxu0 %v200
      %v305 = vpop.f32.mrb[0].mxu0
      %v306 = vadd.f32 0.0, %v305
      %v307 = vpop.f32.mrb[0].mxu0
      %308 = vmatprep.mubr.f32.mxu0 0.0
      %309 = vmatmul.mubr.f32.gmra.mrb[0].mxu0 %v203
      %v310 = vpop.f32.mrb[0].mxu0
      %v311 = vadd.f32 0.0, %v310
      %v312 = vpop.f32.mrb[0].mxu0
      %313 = vdwg.mxu0
      %v314 = vld [vmem:[%s2] sm:$0x1]
      %v316 = vlaneseq
      %v317 = vshrl.u32 %v316, 7
      %v318 = vsub.s32 0, %v317
      %v319 = vrot.slane %v314, %v318
      %v321 = vadd.f32 %v319, %v276
      %v322 = vadd.f32 %v319, 0.0
      %v323 = vadd.f32 %v319, %v281
      %v324 = vadd.f32 %v319, %v286
      %v325 = vadd.f32 %v319, %v291
      %v326 = vadd.f32 %v319, %v296
      %v327 = vadd.f32 %v319, %v301
      %v328 = vadd.f32 %v319, %v306
      %v329 = vadd.f32 %v319, %v311
      %v338 = vrot.slane %v276, 7
      %v339 = vrot.slane %v281, 7
      %v340 = vrot.slane %v286, 7
      %v341 = vrot.slane %v291, 7
      %v342 = vrot.slane %v296, 7
      %v343 = vrot.slane %v301, 7
      %v344 = vrot.slane %v306, 7
      %v345 = vrot.slane %v311, 7
      %346 = vrot.lane.b32.xlu0 %v338, 108
      %v347 = vpop.permute.xlu0 %346
      %348 = vrot.lane.b32.xlu0 %v339, 108
      %v349 = vpop.permute.xlu0 %348
      %350 = vrot.lane.b32.xlu0 %v340, 108
      %v351 = vpop.permute.xlu0 %350
      %352 = vrot.lane.b32.xlu0 %v341, 108
      %v353 = vpop.permute.xlu0 %352
      %354 = vrot.lane.b32.xlu0 %v342, 108
      %v355 = vpop.permute.xlu0 %354
      %356 = vrot.lane.b32.xlu0 %v343, 108
      %v357 = vpop.permute.xlu0 %356
      %358 = vrot.lane.b32.xlu0 %v344, 108
      %v359 = vpop.permute.xlu0 %358
      %360 = vrot.lane.b32.xlu0 %v345, 108
      %v361 = vpop.permute.xlu0 %360
      %vm370 = vcmask 1040384
      %v371 = vsel %vm370, 0.0, %v347
      %v372 = vsel %vm370, 0.0, %v349
      %v373 = vsel %vm370, 0.0, %v351
      %v374 = vsel %vm370, 0.0, %v353
      %v375 = vsel %vm370, 0.0, %v355
      %v376 = vsel %vm370, 0.0, %v357
      %v377 = vsel %vm370, 0.0, %v359
      %v378 = vsel %vm370, 0.0, %v361
      %v379 = vadd.f32 %v321, %v371
      %v380 = vadd.f32 %v322, %v347
      %v381 = vadd.f32 %v323, %v372
      %v382 = vadd.f32 %v322, %v349
      %v383 = vadd.f32 %v324, %v373
      %v384 = vadd.f32 %v322, %v351
      %v385 = vadd.f32 %v325, %v374
      %v386 = vadd.f32 %v322, %v353
      %v387 = vadd.f32 %v326, %v375
      %v388 = vadd.f32 %v322, %v355
      %v389 = vadd.f32 %v327, %v376
      %v390 = vadd.f32 %v322, %v357
      %v391 = vadd.f32 %v328, %v377
      %v392 = vadd.f32 %v322, %v359
      %v393 = vadd.f32 %v329, %v378
      %v394 = vadd.f32 %v322, %v361
      %v395 = vadd.f32 %v322, 0.0
      %397 = vrot.lane.b32.xlu0 %v276, 88
      %v398 = vpop.permute.xlu0 %397
      %399 = vrot.lane.b32.xlu0 0.0, 88
      %v400 = vpop.permute.xlu0 %399
      %401 = vrot.lane.b32.xlu0 %v281, 88
      %v402 = vpop.permute.xlu0 %401
      %403 = vrot.lane.b32.xlu0 %v286, 88
      %v404 = vpop.permute.xlu0 %403
      %405 = vrot.lane.b32.xlu0 %v291, 88
      %v406 = vpop.permute.xlu0 %405
      %407 = vrot.lane.b32.xlu0 %v296, 88
      %v408 = vpop.permute.xlu0 %407
      %409 = vrot.lane.b32.xlu0 %v301, 88
      %v410 = vpop.permute.xlu0 %409
      %411 = vrot.lane.b32.xlu0 %v306, 88
      %v412 = vpop.permute.xlu0 %411
      %413 = vrot.lane.b32.xlu0 %v311, 88
      %v414 = vpop.permute.xlu0 %413
      %v424 = vadd.f32 %v379, 0.0
      %v425 = vadd.f32 %v380, 0.0
      %v426 = vadd.f32 %v381, %v398
      %v427 = vadd.f32 %v382, %v400
      %v428 = vadd.f32 %v383, %v402
      %v429 = vadd.f32 %v384, %v400
      %v430 = vadd.f32 %v385, %v404
      %v431 = vadd.f32 %v386, %v400
      %v432 = vadd.f32 %v387, %v406
      %v433 = vadd.f32 %v388, %v400
      %v434 = vadd.f32 %v389, %v408
      %v435 = vadd.f32 %v390, %v400
      %v436 = vadd.f32 %v391, %v410
      %v437 = vadd.f32 %v392, %v400
      %v438 = vadd.f32 %v393, %v412
      %v439 = vadd.f32 %v394, %v400
      %v440 = vadd.f32 %v395, %v414
      %v441 = vadd.f32 %v395, %v400
      %442 = vrot.lane.b32.xlu0 %v338, 68
      %v443 = vpop.permute.xlu0 %442
      %444 = vrot.lane.b32.xlu0 %v339, 68
      %v445 = vpop.permute.xlu0 %444
      %446 = vrot.lane.b32.xlu0 %v340, 68
      %v447 = vpop.permute.xlu0 %446
      %448 = vrot.lane.b32.xlu0 %v341, 68
      %v449 = vpop.permute.xlu0 %448
      %450 = vrot.lane.b32.xlu0 %v342, 68
      %v451 = vpop.permute.xlu0 %450
      %452 = vrot.lane.b32.xlu0 %v343, 68
      %v453 = vpop.permute.xlu0 %452
      %454 = vrot.lane.b32.xlu0 %v344, 68
      %v455 = vpop.permute.xlu0 %454
      %456 = vrot.lane.b32.xlu0 %v345, 68
      %v457 = vpop.permute.xlu0 %456
      %v466 = vsel %vm370, 0.0, %v443
      %v467 = vsel %vm370, 0.0, %v445
      %v468 = vsel %vm370, 0.0, %v447
      %v469 = vsel %vm370, 0.0, %v449
      %v470 = vsel %vm370, 0.0, %v451
      %v471 = vsel %vm370, 0.0, %v453
      %v472 = vsel %vm370, 0.0, %v455
      %v473 = vsel %vm370, 0.0, %v457
      %v474 = vadd.f32 %v424, 0.0
      %v475 = vadd.f32 %v425, 0.0
      %v476 = vadd.f32 %v426, %v466
      %v477 = vadd.f32 %v427, %v443
      %v478 = vadd.f32 %v428, %v467
      %v479 = vadd.f32 %v429, %v445
      %v480 = vadd.f32 %v430, %v468
      %v481 = vadd.f32 %v431, %v447
      %v482 = vadd.f32 %v432, %v469
      %v483 = vadd.f32 %v433, %v449
      %v484 = vadd.f32 %v434, %v470
      %v485 = vadd.f32 %v435, %v451
      %v486 = vadd.f32 %v436, %v471
      %v487 = vadd.f32 %v437, %v453
      %v488 = vadd.f32 %v438, %v472
      %v489 = vadd.f32 %v439, %v455
      %v490 = vadd.f32 %v440, %v473
      %v491 = vadd.f32 %v441, %v457
      %vm492 = vcmask 162816
      %493 = vst.msk [vmem:[%s170] sm:$0xff] %vm492, %v474
      %vm494 = vcmask 155648
      %495 = vst.msk [vmem:[%s170 + $0x8] sm:$0x1] %vm494, %v475
      %496 = vst.msk [vmem:[%s170 + $0x10] sm:$0xff] %vm492, %v476
      %497 = vst.msk [vmem:[%s170 + $0x18] sm:$0x1] %vm494, %v477
      %498 = vst.msk [vmem:[%s170 + $0x20] sm:$0xff] %vm492, %v478
      %499 = vst.msk [vmem:[%s170 + $0x28] sm:$0x1] %vm494, %v479
      %500 = vst.msk [vmem:[%s170 + $0x30] sm:$0xff] %vm492, %v480
      %501 = vst.msk [vmem:[%s170 + $0x38] sm:$0x1] %vm494, %v481
      %502 = vst.msk [vmem:[%s170 + $0x40] sm:$0xff] %vm492, %v482
      %503 = vst.msk [vmem:[%s170 + $0x48] sm:$0x1] %vm494, %v483
      %504 = vst.msk [vmem:[%s170 + $0x50] sm:$0xff] %vm492, %v484
      %505 = vst.msk [vmem:[%s170 + $0x58] sm:$0x1] %vm494, %v485
      %506 = vst.msk [vmem:[%s170 + $0x60] sm:$0xff] %vm492, %v486
      %507 = vst.msk [vmem:[%s170 + $0x68] sm:$0x1] %vm494, %v487
      %508 = vst.msk [vmem:[%s170 + $0x70] sm:$0xff] %vm492, %v488
      %509 = vst.msk [vmem:[%s170 + $0x78] sm:$0x1] %vm494, %v489
      %510 = vst.msk [vmem:[%s170 + $0x80] sm:$0xff] %vm492, %v490
      %511 = vst.msk [vmem:[%s170 + $0x88] sm:$0x1] %vm494, %v491
      %p512 = scmp.lt.s32.totalorder %s14, 1
      %s513 = scalar_select %p512, %s14, 1
      %s514 = smul.addr %s513, 18
      %s515 = smul.addr %s514, 8
      %s516 = scalar_lea.vmem %s3, %s515
      // Predicated region
      $region33: #{transition_up_forward.1} parent=31 // pred_check
        %p517 = pneg %p100
      $region34: #{transition_up_forward.1} parent=31 // pred_check_branch
        %519 = sbr.rel (%p517) target = $region36
      $region35: #{transition_up_forward.1} parent=31 // pred_region
        _
      $region36: #{transition_up_forward.1} parent=31 // pred_fallthru
        _
    $region32: #{transition_up_forward.1} parent=5 // pred_fallthru
      _
    %p520 = scmp.le.s32.totalorder 2, %s9
    // Predicated region
    $region37: #{transition_up_forward.1} parent=5 // pred_check
      %p521 = pneg %p520
    $region38: #{transition_up_forward.1} parent=5 // pred_check_branch
      %523 = sbr.rel (%p521) target = $region40
    $region39: #{transition_up_forward.1} parent=5 // pred_region
      %s524 = ssub.s32 %s9, 2
      // Predicated region
      $region41: #{transition_up_forward.1} parent=39 // pred_check
        %p525 = pneg %p106
      $region42: #{transition_up_forward.1} parent=39 // pred_check_branch
        %527 = sbr.rel (%p525) target = $region44
      $region43: #{transition_up_forward.1} parent=39 // pred_region
        %p528 = scmp.lt.s32.totalorder %s15, 1
        %s529 = scalar_select %p528, %s15, 1
        %s530 = smul.addr %s529, 18
        %s531 = smul.addr %s530, 8
        %s532 = scalar_lea.vmem %s3, %s531
      $region44: #{transition_up_forward.1} parent=39 // pred_fallthru
        _
    $region40: #{transition_up_forward.1} parent=5 // pred_fallthru
      _
  $region6: #{transition_up_forward.1} parent=0 // loop_footer
    %s13 = sadd.s32 1, %s9
  $region7: #{transition_up_forward.1} parent=0 // loop_footer_branch
    %8 = sbr.rel target = $region3
  $region8: #{transition_up_forward.1} parent=0 // loop_exit
    _

</llo_original>
